<compile_context>
chip_gen: v7x
topology: tpu7x:2x2x1
jax: 0.10.0
libtpu: 0.0.40
codegen_flags: <defaults>
</compile_context>

<pallas_src>
import math

import jax
import jax.numpy as jnp
from jax.experimental import pallas as pl
from jax.experimental.pallas import tpu as pltpu


def _round_up(x, m):
    return ((x + m - 1) // m) * m


def _vmem_limit_bytes():
    # Generation-aware VMEM budget: ~75% of physical (64 MiB on v7x,
    # 128 MiB on v5e/v6e), capped at 96 MiB.  Tiles used here need far less,
    # but this lets larger A tiles fit on v5e/v6e without the 32 MiB scoped
    # default shrinking the pipeline.
    try:
        cap = pltpu.get_tpu_info().vmem_capacity_bytes
    except Exception:
        cap = 64 * 1024 * 1024
    return int(min(cap * 3 // 4, 96 * 1024 * 1024))


def _make_dad_kernel(tm, tn):
    def kernel(a_ref, x_ref, out_ref, y_ref):
        i = pl.program_id(0)
        j = pl.program_id(1)

        # Fresh y-accumulator for every row-block i (j is the inner,
        # sequential reduction axis; i may be split across TensorCores).
        @pl.when(j == 0)
        def _init():
            y_ref[...] = jnp.zeros_like(y_ref)

        # y_i += A_ij @ x_j  on the MXU, contracting over TN (deep contraction,
        # so bf16/low-precision A is consumed natively with f32 accumulation).
        xj = x_ref[pl.ds(pl.multiple_of(j * tn, tn), tn), :]
        y_ref[...] += jnp.dot(a_ref[...], xj, preferred_element_type=jnp.float32)

        # Epilogue for this row-block: partial_i = sum(x_i * y_i).
        @pl.when(j == pl.num_programs(1) - 1)
        def _finalize():
            xi = x_ref[pl.ds(pl.multiple_of(i * tm, tm), tm), :]
            part = jnp.sum(xi.astype(jnp.float32) * y_ref[...])
            # Lane/sublane-aligned (8,128) output block per row-block i; the
            # scalar partial is broadcast, the wrapper reads out[::8, 0].
            out_ref[...] = jnp.full((8, 128), part, dtype=jnp.float32)

    return kernel


def _pick_tile(requested, n128, candidates):
    if requested is not None:
        return requested
    for c in candidates:
        if c <= n128 and n128 % c == 0:
            return c
    return 128


def dad_loss(A, x, *, tm=None, tn=None):
    """trace(x.T @ A @ x) with A: (N, N), x: (N, M).  Returns an f32 scalar.

    A should be stored (not cast at call time) in the streaming dtype you
    want on HBM — bf16 A halves the dominant HBM traffic; accumulation is f32.
    """
    N, M = x.shape
    assert A.shape == (N, N), (A.shape, x.shape)

    n128 = _round_up(N, 128)
    # Rectangular tiles: long minor dim (contiguous DMA rows, deep MXU
    # contraction), moderate row-block.  ~0.25–2 MiB per f32 A tile.
    tn_ = _pick_tile(tn, n128, (2048, 1024, 512, 256, 128))
    tm_ = _pick_tile(tm, n128, (512, 256, 128))

    # Zero-pad N so both tiles divide it exactly.  Zero rows of x / zero
    # rows+cols of A do not change trace(x.T A x).
    n_pad = _round_up(N, math.lcm(tm_, tn_))
    if n_pad != N:
        A = jnp.pad(A, ((0, n_pad - N), (0, n_pad - N)))
        x = jnp.pad(x, ((0, n_pad - N), (0, 0)))

    n_i = n_pad // tm_
    n_j = n_pad // tn_

    out = pl.pallas_call(
        _make_dad_kernel(tm_, tn_),
        out_shape=jax.ShapeDtypeStruct((8 * n_i, 128), jnp.float32),
        grid_spec=pltpu.PrefetchScalarGridSpec(
            num_scalar_prefetch=0,
            grid=(n_i, n_j),
            in_specs=[
                # A: the only streamed operand, tiled (TM, TN), double-buffered.
                pl.BlockSpec((tm_, tn_), lambda i, j: (i, j)),
                # x: fully resident (fetched once; block index never changes).
                pl.BlockSpec((n_pad, M), lambda i, j: (0, 0)),
            ],
            # One (8, 128) partial block per row-block i.
            out_specs=pl.BlockSpec((8, 128), lambda i, j: (i, 0)),
            # Small resident y-accumulator: (TM, M) f32.
            scratch_shapes=[pltpu.VMEM((tm_, M), jnp.float32)],
        ),
        compiler_params=pltpu.CompilerParams(
            # i: independent row-blocks -> shard across TensorCores (v7x
            # megacore; no-op on single-TC v5e/v6e).  j: sequential reduction.
            dimension_semantics=("parallel", "arbitrary"),
            vmem_limit_bytes=_vmem_limit_bytes(),
        ),
    )(A, x)

    # Sum the per-row-block partials (tiny) in plain JAX.
    return jnp.sum(out[::8, 0])


if __name__ == "__main__":
    key = jax.random.PRNGKey(0)
    k_a, k_x = jax.random.split(key)

    # Small shapes consistent with the module: A (N, N) parameter, x (N, M).
    N, M = 256, 32
    A = jax.random.normal(k_a, (N, N), dtype=jnp.float32)
    x = jax.random.normal(k_x, (N, M), dtype=jnp.float32)

    # Forced 128x128 tiles -> grid (2, 2): exercises init / accumulate /
    # per-row-block finalize / partial-sum paths.
    loss = dad_loss(A, x, tm=128, tn=128)
    jax.block_until_ready(loss)
    ref = jnp.trace(x.T @ A @ x)
    assert jnp.allclose(loss, ref, rtol=1e-4, atol=1e-2), (loss, ref)

    # Auto-tiled path + bf16 A (halves the dominant HBM stream; f32 accum).
    loss_bf16 = dad_loss(A.astype(jnp.bfloat16), x.astype(jnp.bfloat16))
    jax.block_until_ready(loss_bf16)

    # Irregular N -> zero-padding path (trace unchanged by zero rows/cols).
    N2 = 200
    A2 = jax.random.normal(k_a, (N2, N2), dtype=jnp.float32)
    x2 = jax.random.normal(k_x, (N2, M), dtype=jnp.float32)
    loss_pad = dad_loss(A2, x2)
    jax.block_until_ready(loss_pad)
    ref_pad = jnp.trace(x2.T @ A2 @ x2)
    assert jnp.allclose(loss_pad, ref_pad, rtol=1e-4, atol=1e-2), (loss_pad, ref_pad)

    # TODO(synk): fp8 A on v7x / int8 A on v5e-v6e for a further 2x on the
    # A stream (requires a quantized-A storage format upstream).
    print("KERNEL_OK")
</pallas_src>

<mosaic_0001>
module attributes {stable_mosaic.version = 11 : i64} {
  func.func @kernel(%arg0: i32, %arg1: i32, %arg2: memref<128x128xf32, #tpu.memory_space<vmem>>, %arg3: memref<256x32xf32, #tpu.memory_space<vmem>>, %arg4: memref<8x128xf32, #tpu.memory_space<vmem>>, %arg5: memref<128x32xf32, #tpu.memory_space<vmem>>) attributes {dimension_semantics = [#tpu.dimension_semantics<parallel>, #tpu.dimension_semantics<arbitrary>], iteration_bounds = array<i64: 2, 2>, scalar_prefetch = 0 : i64, scratch_operands = 1 : i64, tpu.core_type = #tpu.core_type<tc>, window_params = [{transform_indices = @transform_0, window_bounds = array<i64: 128, 128>}, {pipeline_mode = #tpu.pipeline_mode<synchronous>, transform_indices = @transform_1, window_bounds = array<i64: 256, 32>}, {transform_indices = @transform_2, window_bounds = array<i64: 8, 128>}]} {
    %c0_i32 = arith.constant 0 : i32
    %0 = arith.cmpi eq, %arg1, %c0_i32 : i32
    %1 = arith.extui %0 : i1 to i32
    %c0_i32_0 = arith.constant 0 : i32
    %2 = arith.cmpi ne, %1, %c0_i32_0 : i32
    scf.if %2 {
      %cst_8 = arith.constant 0.000000e+00 : f32
      %15 = vector.broadcast %cst_8 : f32 to vector<128x32xf32>
      %c0_9 = arith.constant 0 : index
      %c0_10 = arith.constant 0 : index
      %16 = vector.load %arg5[%c0_9, %c0_10] : memref<128x32xf32, #tpu.memory_space<vmem>>, vector<128x32xf32>
      tpu.vector_store %arg5[%c0_9, %c0_10], %15 {strides = array<i32>} : memref<128x32xf32, #tpu.memory_space<vmem>>, vector<128x32xf32>,
    } else {
    }
    %c128_i32 = arith.constant 128 : i32
    %3 = arith.muli %arg1, %c128_i32 : i32
    %4 = tpu.assume_multiple %3, 128 : i32
    %5 = arith.index_cast %4 : i32 to index
    %c0 = arith.constant 0 : index
    %6 = vector.load %arg3[%5, %c0] : memref<256x32xf32, #tpu.memory_space<vmem>>, vector<128x32xf32>
    %c0_1 = arith.constant 0 : index
    %c0_2 = arith.constant 0 : index
    %7 = vector.load %arg5[%c0_1, %c0_2] : memref<128x32xf32, #tpu.memory_space<vmem>>, vector<128x32xf32>
    %c0_3 = arith.constant 0 : index
    %c0_4 = arith.constant 0 : index
    %8 = vector.load %arg2[%c0_3, %c0_4] : memref<128x128xf32, #tpu.memory_space<vmem>>, vector<128x128xf32>
    %cst = arith.constant dense<0.000000e+00> : vector<128x32xf32>
    %9 = tpu.matmul %8, %6, %cst {dimension_numbers = #tpu.dot_dimension_numbers<[1], [0], [0], [1], [0, 0, 1, 1], [], []>} : vector<128x128xf32>, vector<128x32xf32>, vector<128x32xf32> -> vector<128x32xf32>
    %10 = arith.addf %7, %9 : vector<128x32xf32>
    %c0_5 = arith.constant 0 : index
    %c0_6 = arith.constant 0 : index
    %11 = vector.load %arg5[%c0_5, %c0_6] : memref<128x32xf32, #tpu.memory_space<vmem>>, vector<128x32xf32>
    tpu.vector_store %arg5[%c0_5, %c0_6], %10 {strides = array<i32>} : memref<128x32xf32, #tpu.memory_space<vmem>>, vector<128x32xf32>,
    %c1_i32 = arith.constant 1 : i32
    %12 = arith.cmpi eq, %arg1, %c1_i32 : i32
    %13 = arith.extui %12 : i1 to i32
    %c0_i32_7 = arith.constant 0 : i32
    %14 = arith.cmpi ne, %13, %c0_i32_7 : i32
    scf.if %14 {
      %c128_i32_8 = arith.constant 128 : i32
      %15 = arith.muli %arg0, %c128_i32_8 : i32
      %16 = tpu.assume_multiple %15, 128 : i32
      %17 = arith.index_cast %16 : i32 to index
      %c0_9 = arith.constant 0 : index
      %18 = vector.load %arg3[%17, %c0_9] : memref<256x32xf32, #tpu.memory_space<vmem>>, vector<128x32xf32>
      %c0_10 = arith.constant 0 : index
      %c0_11 = arith.constant 0 : index
      %19 = vector.load %arg5[%c0_10, %c0_11] : memref<128x32xf32, #tpu.memory_space<vmem>>, vector<128x32xf32>
      %20 = arith.mulf %18, %19 : vector<128x32xf32>
      %21 = vector.shape_cast %20 : vector<128x32xf32> to vector<1x128x32xf32>
      %cst_12 = arith.constant dense<0.000000e+00> : vector<1xf32>
      %22 = vector.multi_reduction <add>, %21, %cst_12 [1, 2] : vector<1x128x32xf32> to vector<1xf32>
      %23 = vector.shape_cast %22 : vector<1xf32> to vector<1x1x1xf32>
      %24 = vector.extract %23[0, 0, 0] : f32 from vector<1x1x1xf32>
      %25 = vector.broadcast %24 : f32 to vector<8x128xf32>
      %c0_13 = arith.constant 0 : index
      %c0_14 = arith.constant 0 : index
      %26 = vector.load %arg4[%c0_13, %c0_14] : memref<8x128xf32, #tpu.memory_space<vmem>>, vector<8x128xf32>
      tpu.vector_store %arg4[%c0_13, %c0_14], %25 {strides = array<i32>} : memref<8x128xf32, #tpu.memory_space<vmem>>, vector<8x128xf32>,
    } else {
    }
    return
  }
  func.func @transform_0(%arg0: i32, %arg1: i32) -> (i32, i32) {
    %c0_i32 = arith.constant 0 : i32
    return %arg0, %arg1 : i32, i32
  }
  func.func @transform_1(%arg0: i32, %arg1: i32) -> (i32, i32) {
    %c0_i32 = arith.constant 0 : i32
    %c0_i32_0 = arith.constant 0 : i32
    %c0_i32_1 = arith.constant 0 : i32
    return %c0_i32, %c0_i32_0 : i32, i32
  }
  func.func @transform_2(%arg0: i32, %arg1: i32) -> (i32, i32) {
    %c0_i32 = arith.constant 0 : i32
    %c0_i32_0 = arith.constant 0 : i32
    return %arg0, %c0_i32 : i32, i32
  }
}

</mosaic_0001>

<llo_original>
// kernel: tpu_custom_call.1
$region0: #{tpu_custom_call.1}
  #allocation0 [shape = 'u32[]', space=smem, size = 0x4, offset = 0x4, fixed_abs, tag = 'smem constant byte address 0x4 - core index']
  #allocation1 [shape = 'u32[144,128]{1,0:T(1,128)}', space=vmem, size = 0x12000, scoped, tag = 'internal scratch']
  #allocation2 [shape = 'f32[128,32]{1,0:T(8,128)}', space=vmem, size = 0x10000, scoped, tag = 'scratch operand']
  %s0 = inlined_call_operand.hbm [shape: f32[256,256], index: 0, kind: input, shape index: {}]
  %s1 = inlined_call_operand.vmem [shape: f32[256,32], index: 1, kind: input, shape index: {}]
  %s2 = inlined_call_operand.hbm [shape: f32[16,128], index: 2, kind: output, shape index: {}]
  %s3 = sld [smem:[#allocation0]]
  $region53: #{tpu_custom_call.1} parent=0
    _
  %s5 = ssub.s32 1, %s3
  %s6 = scalar_select 0, %s5, %s3
  $region1: #{tpu_custom_call.1} parent=0
    #allocation3 [shape = 'u8[131072]{0}', space=vmem, size = 0x20000, scoped, tag = 'input window, operand 0']
    #allocation4 [shape = 's32[2]{0}', space=sflag, size = 0x8, scoped, tag = 'scoped memory for tpu_custom_call.1']
    #allocation5 [shape = 's32[2]{0}', space=sflag, size = 0x8, scoped, tag = 'scoped memory for tpu_custom_call.1']
    #allocation6 [shape = 'u8[8192]{0}', space=vmem, size = 0x2000, scoped, tag = 'output window, operand 0']
    %7 = vsyncpa [#allocation4], 0
    %s8 = scalar_lea.sflag [#allocation4], 1
    %9 = vsyncpa %s8, 0
    %10 = vsyncpa [#allocation5], 0
    %s11 = scalar_lea.sflag [#allocation5], 1
    %12 = vsyncpa %s11, 0
    loop: start=0, step=1, limit=6
    $region2: #{tpu_custom_call.1} parent=1 // loop_pre_header
      _
    $region3: #{tpu_custom_call.1} parent=1 // loop_header
      %s14 = sphi 0, %s18
      %p15 = scmp.ge.s32.totalorder %s14, 6
      %s21 = sphi 0, %s33
      %s22 = sphi 0, %s29
      %s23 = sphi 0, %s21
      %s24 = sphi 0, %s22
      %s25 = sphi 0, %s23
      %s26 = sphi 0, %s24
      %s38 = sphi 0, %s40
      %s41 = sphi 0, %s38
      %s42 = sphi 0, %s41
      %s58 = sphi 0, %s42
      %s62 = sphi 0, %s62
      %s64 = sphi 0, %s62
      %s65 = sphi 0, %s64
      %s79 = sphi 0, %s65
      %s85 = sphi 0, %s87
      %s88 = sphi 0, %s85
      %s89 = sphi 0, %s88
      %s105 = sphi 0, %s89
    $region4: #{tpu_custom_call.1} parent=1 // loop_header_branch
      %17 = sbr.rel (%p15) target = $region8
    $region5: #{tpu_custom_call.1} parent=1 // loop_body
      %s19 = ssub.s32 %s14, 1
      %s20 = ssub.s32 %s14, 2
      %s27 = sadd.s32 1, %s22
      %p28 = scmp.ge.s32.totalorder %s27, 2
      %s29 = scalar_select %p28, 0, %s27
      %s30 = sadd.s32 1, %s21
      %s31 = scalar_select %p28, %s30, %s21
      %p32 = scmp.ge.s32.totalorder %s31, 2
      %s33 = scalar_select %p32, 0, %s31
      %s34 = ssub.s32 %s21, %s33
      %s35 = ssub.s32 %s22, %s29
      %s36 = sor.u32 %s34, %s35
      %p37 = scmp.eq.s32.totalorder %s36, 0
      %s39 = sadd.s32 %s38, 1
      %s40 = scalar_select %p37, %s38, %s39
      %p43 = pneg %p37
      %p44 = scmp.eq.s32.totalorder %s14, 3
      %p45 = por %p43, %p44
      %p46 = scmp.ne.s32.totalorder %s38, %s41
      %p47 = scmp.eq.s32.totalorder %s14, 0
      %p48 = por %p46, %p47
      %p49 = scmp.ne.s32.totalorder %s38, %s41
      %p50 = scmp.eq.s32.totalorder %s19, 3
      %p51 = por %p49, %p50
      %p52 = scmp.ne.s32.totalorder %s41, %s42
      %p53 = scmp.eq.s32.totalorder %s19, 0
      %p54 = por %p52, %p53
      %p55 = scmp.ne.s32.totalorder %s41, %s42
      %p56 = scmp.eq.s32.totalorder %s20, 3
      %p57 = por %p55, %p56
      %p59 = scmp.ne.s32.totalorder %s42, %s58
      %p60 = scmp.eq.s32.totalorder %s20, 0
      %p61 = por %p59, %p60
      %s63 = sadd.s32 %s62, 1
      %p66 = scmp.eq.s32.totalorder %s14, 3
      %p67 = scmp.ne.s32.totalorder %s62, %s64
      %p68 = scmp.eq.s32.totalorder %s14, 0
      %p69 = por %p67, %p68
      %p70 = scmp.ne.s32.totalorder %s62, %s64
      %p71 = scmp.eq.s32.totalorder %s19, 3
      %p72 = por %p70, %p71
      %p73 = scmp.ne.s32.totalorder %s64, %s65
      %p74 = scmp.eq.s32.totalorder %s19, 0
      %p75 = por %p73, %p74
      %p76 = scmp.ne.s32.totalorder %s64, %s65
      %p77 = scmp.eq.s32.totalorder %s20, 3
      %p78 = por %p76, %p77
      %p80 = scmp.ne.s32.totalorder %s65, %s79
      %p81 = scmp.eq.s32.totalorder %s20, 0
      %p82 = por %p80, %p81
      %s83 = ssub.s32 %s21, %s33
      %p84 = scmp.eq.s32.totalorder %s83, 0
      %s86 = sadd.s32 %s85, 1
      %s87 = scalar_select %p84, %s85, %s86
      %p90 = pneg %p84
      %p91 = scmp.eq.s32.totalorder %s14, 3
      %p92 = por %p90, %p91
      %p93 = scmp.ne.s32.totalorder %s85, %s88
      %p94 = scmp.eq.s32.totalorder %s14, 0
      %p95 = por %p93, %p94
      %p96 = scmp.ne.s32.totalorder %s85, %s88
      %p97 = scmp.eq.s32.totalorder %s19, 3
      %p98 = por %p96, %p97
      %p99 = scmp.ne.s32.totalorder %s88, %s89
      %p100 = scmp.eq.s32.totalorder %s19, 0
      %p101 = por %p99, %p100
      %p102 = scmp.ne.s32.totalorder %s88, %s89
      %p103 = scmp.eq.s32.totalorder %s20, 3
      %p104 = por %p102, %p103
      %p106 = scmp.ne.s32.totalorder %s89, %s105
      %p107 = scmp.eq.s32.totalorder %s20, 0
      %p108 = por %p106, %p107
      %p109 = scmp.le.s32.totalorder 1, %s14
      %p110 = scmp.lt.s32.totalorder %s14, 5
      %p111 = pnand %p109, %p110
      %p112 = pneg %p111
      // Predicated region
      $region9: #{tpu_custom_call.1} parent=5 // pred_check
        _
      $region10: #{tpu_custom_call.1} parent=5 // pred_check_branch
        %114 = sbr.rel (%p111) target = $region12
      $region11: #{tpu_custom_call.1} parent=5 // pred_region
        %s115 = ssub.s32 %s14, 1
        // Predicated region
        $region13: #{tpu_custom_call.1} parent=11 // pred_check
          %p116 = pneg %p75
        $region14: #{tpu_custom_call.1} parent=11 // pred_check_branch
          %118 = sbr.rel (%p116) target = $region16
        $region15: #{tpu_custom_call.1} parent=11 // pred_region
          _
        $region16: #{tpu_custom_call.1} parent=11 // pred_fallthru
          _
      $region12: #{tpu_custom_call.1} parent=5 // pred_fallthru
        _
      %p119 = scmp.lt.s32.totalorder %s14, 4
      // Predicated region
      $region17: #{tpu_custom_call.1} parent=5 // pred_check
        %p120 = pneg %p119
      $region18: #{tpu_custom_call.1} parent=5 // pred_check_branch
        %122 = sbr.rel (%p120) target = $region20
      $region19: #{tpu_custom_call.1} parent=5 // pred_region
        // Predicated region
        $region21: #{tpu_custom_call.1} parent=19 // pred_check
          %p123 = pneg %p48
        $region22: #{tpu_custom_call.1} parent=19 // pred_check_branch
          %125 = sbr.rel (%p123) target = $region24
        $region23: #{tpu_custom_call.1} parent=19 // pred_region
          %s126 = sand.u32 %s38, 1
          %s127 = scalar_lea.sflag [#allocation4], %s126
          %s128 = sand.u32 %s38, 1
          %s129 = smul.addr %s128, 128
          %s130 = scalar_lea.vmem [#allocation3], %s129
          %s131 = smul.u32 16, %s21
          %s133 = ssub.s32 2048, 2048
          %134 = vsyncadd %s127, %s133
          %s135 = smul.addr %s131, 2
          %s136 = sadd.s32 %s22, %s135
          %s137 = smul.addr %s136, 128
          %s138 = scalar_lea.hbm %s0, %s137
          %s139 = sshll.u32 %s130, 4
          %s140 = int_to_ptr.vmem [resolvable:$true] %s139
          %145 = dma.hbm_to_vmem [thread:$0]  %s138, 2048, %s140, %s127, 256, 128, 8
        $region24: #{tpu_custom_call.1} parent=19 // pred_fallthru
          _
      $region20: #{tpu_custom_call.1} parent=5 // pred_fallthru
        _
      %p146 = scmp.le.s32.totalorder 1, %s14
      %p147 = scmp.lt.s32.totalorder %s14, 5
      %p148 = pnand %p146, %p147
      %p149 = pneg %p148
      // Predicated region
      $region25: #{tpu_custom_call.1} parent=5 // pred_check
        _
      $region26: #{tpu_custom_call.1} parent=5 // pred_check_branch
        %151 = sbr.rel (%p148) target = $region28
      $region27: #{tpu_custom_call.1} parent=5 // pred_region
        %s152 = ssub.s32 %s14, 1
        %s153 = sand.u32 %s41, 1
        %s154 = scalar_lea.sflag [#allocation4], %s153
        %s155 = sand.u32 %s41, 1
        %s156 = smul.addr %s155, 128
        %s157 = scalar_lea.vmem [#allocation3], %s156
        // Predicated region
        $region29: #{tpu_custom_call.1} parent=27 // pred_check
          %p158 = pneg %p54
        $region30: #{tpu_custom_call.1} parent=27 // pred_check_branch
          %160 = sbr.rel (%p158) target = $region32
        $region31: #{tpu_custom_call.1} parent=27 // pred_region
          %161 = dma.done %s154, 2048
        $region32: #{tpu_custom_call.1} parent=27 // pred_fallthru
          _
        %s162 = sand.u32 %s41, 1
        %s163 = scalar_lea.sflag [#allocation4], %s162
        %s164 = sand.u32 %s41, 1
        %s165 = smul.addr %s164, 128
        %s166 = scalar_lea.vmem [#allocation3], %s165
        %p167 = pneg %p54
        %p168 = pneg %p51
        %p169 = pneg %p75
        %p170 = pneg %p72
        %p171 = pneg %p101
        %p172 = pneg %p98
        %s173 = sand.u32 %s88, 1
        %s174 = scalar_lea.sflag [#allocation5], %s173
        %s175 = sand.u32 %s88, 1
        %s176 = smul.addr %s175, 8
        %s177 = scalar_lea.vmem [#allocation6], %s176
        %s178 = smul.u32 16, %s23
        %p179 = scmp.eq.s32.totalorder %s24, 0
        // Predicated region
        $region33: #{tpu_custom_call.1} parent=27 // pred_check
          %p180 = pneg %p179
        $region34: #{tpu_custom_call.1} parent=27 // pred_check_branch
          %182 = sbr.rel (%p180) target = $region36
        $region35: #{tpu_custom_call.1} parent=27 // pred_region
          %vm183 = vcmask 261120
          %184 = vst.msk [vmem:[#allocation2] sm:$0xff] %vm183, 0.0
          %185 = vst.msk [vmem:[#allocation2 + $0x8] sm:$0xff] %vm183, 0.0
          %186 = vst.msk [vmem:[#allocation2 + $0x10] sm:$0xff] %vm183, 0.0
          %187 = vst.msk [vmem:[#allocation2 + $0x18] sm:$0xff] %vm183, 0.0
          %188 = vst.msk [vmem:[#allocation2 + $0x20] sm:$0xff] %vm183, 0.0
          %189 = vst.msk [vmem:[#allocation2 + $0x28] sm:$0xff] %vm183, 0.0
          %190 = vst.msk [vmem:[#allocation2 + $0x30] sm:$0xff] %vm183, 0.0
          %191 = vst.msk [vmem:[#allocation2 + $0x38] sm:$0xff] %vm183, 0.0
          %192 = vst.msk [vmem:[#allocation2 + $0x40] sm:$0xff] %vm183, 0.0
          %193 = vst.msk [vmem:[#allocation2 + $0x48] sm:$0xff] %vm183, 0.0
          %194 = vst.msk [vmem:[#allocation2 + $0x50] sm:$0xff] %vm183, 0.0
          %195 = vst.msk [vmem:[#allocation2 + $0x58] sm:$0xff] %vm183, 0.0
          %196 = vst.msk [vmem:[#allocation2 + $0x60] sm:$0xff] %vm183, 0.0
          %197 = vst.msk [vmem:[#allocation2 + $0x68] sm:$0xff] %vm183, 0.0
          %198 = vst.msk [vmem:[#allocation2 + $0x70] sm:$0xff] %vm183, 0.0
          %199 = vst.msk [vmem:[#allocation2 + $0x78] sm:$0xff] %vm183, 0.0
        $region36: #{tpu_custom_call.1} parent=27 // pred_fallthru
          _
        %s200 = smul.u32 %s24, 128
        %s201 = scalar_lea.vmem %s1, %s200
        %v202 = vld [vmem:[%s201] sm:$0xff]
        %v203 = vld [vmem:[%s201 + $0x8] sm:$0xff]
        %v204 = vld [vmem:[%s201 + $0x10] sm:$0xff]
        %v205 = vld [vmem:[%s201 + $0x18] sm:$0xff]
        %v206 = vld [vmem:[%s201 + $0x20] sm:$0xff]
        %v207 = vld [vmem:[%s201 + $0x28] sm:$0xff]
        %v208 = vld [vmem:[%s201 + $0x30] sm:$0xff]
        %v209 = vld [vmem:[%s201 + $0x38] sm:$0xff]
        %v210 = vld [vmem:[%s201 + $0x40] sm:$0xff]
        %v211 = vld [vmem:[%s201 + $0x48] sm:$0xff]
        %v212 = vld [vmem:[%s201 + $0x50] sm:$0xff]
        %v213 = vld [vmem:[%s201 + $0x58] sm:$0xff]
        %v214 = vld [vmem:[%s201 + $0x60] sm:$0xff]
        %v215 = vld [vmem:[%s201 + $0x68] sm:$0xff]
        %v216 = vld [vmem:[%s201 + $0x70] sm:$0xff]
        %v217 = vld [vmem:[%s201 + $0x78] sm:$0xff]
        %v218 = vld [vmem:[#allocation2] sm:$0xff]
        %v219 = vld [vmem:[#allocation2 + $0x8] sm:$0xff]
        %v220 = vld [vmem:[#allocation2 + $0x10] sm:$0xff]
        %v221 = vld [vmem:[#allocation2 + $0x18] sm:$0xff]
        %v222 = vld [vmem:[#allocation2 + $0x20] sm:$0xff]
        %v223 = vld [vmem:[#allocation2 + $0x28] sm:$0xff]
        %v224 = vld [vmem:[#allocation2 + $0x30] sm:$0xff]
        %v225 = vld [vmem:[#allocation2 + $0x38] sm:$0xff]
        %v226 = vld [vmem:[#allocation2 + $0x40] sm:$0xff]
        %v227 = vld [vmem:[#allocation2 + $0x48] sm:$0xff]
        %v228 = vld [vmem:[#allocation2 + $0x50] sm:$0xff]
        %v229 = vld [vmem:[#allocation2 + $0x58] sm:$0xff]
        %v230 = vld [vmem:[#allocation2 + $0x60] sm:$0xff]
        %v231 = vld [vmem:[#allocation2 + $0x68] sm:$0xff]
        %v232 = vld [vmem:[#allocation2 + $0x70] sm:$0xff]
        %v233 = vld [vmem:[#allocation2 + $0x78] sm:$0xff]
        %v234 = vld [vmem:[%s157] sm:$0xff]
        %v235 = vld [vmem:[%s157 + $0x8] sm:$0xff]
        %v236 = vld [vmem:[%s157 + $0x10] sm:$0xff]
        %v237 = vld [vmem:[%s157 + $0x18] sm:$0xff]
        %v238 = vld [vmem:[%s157 + $0x20] sm:$0xff]
        %v239 = vld [vmem:[%s157 + $0x28] sm:$0xff]
        %v240 = vld [vmem:[%s157 + $0x30] sm:$0xff]
        %v241 = vld [vmem:[%s157 + $0x38] sm:$0xff]
        %v242 = vld [vmem:[%s157 + $0x40] sm:$0xff]
        %v243 = vld [vmem:[%s157 + $0x48] sm:$0xff]
        %v244 = vld [vmem:[%s157 + $0x50] sm:$0xff]
        %v245 = vld [vmem:[%s157 + $0x58] sm:$0xff]
        %v246 = vld [vmem:[%s157 + $0x60] sm:$0xff]
        %v247 = vld [vmem:[%s157 + $0x68] sm:$0xff]
        %v248 = vld [vmem:[%s157 + $0x70] sm:$0xff]
        %v249 = vld [vmem:[%s157 + $0x78] sm:$0xff]
        %250 = vmatprep.subr.mxu0 0.0
        %251 = vmatpush1.msra.mxu0 %v202
        %252 = vmatprep.subr.mxu0 0.0
        %253 = vmatpush1.msra.mxu0 %v203
        %254 = vmatprep.subr.mxu0 0.0
        %255 = vmatpush1.msra.mxu0 %v204
        %256 = vmatprep.subr.mxu0 0.0
        %257 = vmatpush1.msra.mxu0 %v205
        %258 = vmatprep.subr.mxu0 0.0
        %259 = vmatpush1.msra.mxu0 %v206
        %260 = vmatprep.subr.mxu0 0.0
        %261 = vmatpush1.msra.mxu0 %v207
        %262 = vmatprep.subr.mxu0 0.0
        %263 = vmatpush1.msra.mxu0 %v208
        %264 = vmatprep.subr.mxu0 0.0
        %265 = vmatpush1.msra.mxu0 %v209
        %266 = vmatprep.subr.mxu0 0.0
        %267 = vmatpush1.msra.mxu0 %v210
        %268 = vmatprep.subr.mxu0 0.0
        %269 = vmatpush1.msra.mxu0 %v211
        %270 = vmatprep.subr.mxu0 0.0
        %271 = vmatpush1.msra.mxu0 %v212
        %272 = vmatprep.subr.mxu0 0.0
        %273 = vmatpush1.msra.mxu0 %v213
        %274 = vmatprep.subr.mxu0 0.0
        %275 = vmatpush1.msra.mxu0 %v214
        %276 = vmatprep.subr.mxu0 0.0
        %277 = vmatpush1.msra.mxu0 %v215
        %278 = vmatprep.subr.mxu0 0.0
        %279 = vmatpush1.msra.mxu0 %v216
        %280 = vmatprep.subr.mxu0 0.0
        %281 = vmatpush1.msra.mxu0 %v217
        %282 = vmatprep.subr.mxu0 0.0
        %283 = vmatpush1.msra.mxu0 0.0
        %284 = vmatprep.subr.mxu0 0.0
        %285 = vmatpush1.msra.mxu0 0.0
        %286 = vmatprep.subr.mxu0 0.0
        %287 = vmatpush1.msra.mxu0 0.0
        %288 = vmatprep.subr.mxu0 0.0
        %289 = vmatpush1.msra.mxu0 0.0
        %290 = vmatprep.subr.mxu0 0.0
        %291 = vmatpush1.msra.mxu0 0.0
        %292 = vmatprep.subr.mxu0 0.0
        %293 = vmatpush1.msra.mxu0 0.0
        %294 = vmatprep.subr.mxu0 0.0
        %295 = vmatpush1.msra.mxu0 0.0
        %296 = vmatprep.subr.mxu0 0.0
        %297 = vmatpush1.msra.mxu0 0.0
        %298 = vmatprep.subr.mxu0 0.0
        %299 = vmatpush1.msra.mxu0 0.0
        %300 = vmatprep.subr.mxu0 0.0
        %301 = vmatpush1.msra.mxu0 0.0
        %302 = vmatprep.subr.mxu0 0.0
        %303 = vmatpush1.msra.mxu0 0.0
        %304 = vmatprep.subr.mxu0 0.0
        %305 = vmatpush1.msra.mxu0 0.0
        %306 = vmatprep.subr.mxu0 0.0
        %307 = vmatpush1.msra.mxu0 0.0
        %308 = vmatprep.subr.mxu0 0.0
        %309 = vmatpush1.msra.mxu0 0.0
        %310 = vmatprep.subr.mxu0 0.0
        %311 = vmatpush1.msra.mxu0 0.0
        %312 = vmatprep.subr.mxu0 0.0
        %313 = vmatpush1.msra.mxu0 0.0
        %314 = vmatprep.mubr.f32.mxu0 0.0
        %315 = vmatmul.mubr.f32.gmra.mrb[0].mxu0 %v234
        %v316 = vpop.f32.mrb[0].mxu0
        %v317 = vadd.f32 0.0, %v316
        %v318 = vpop.f32.mrb[0].mxu0
        %319 = vmatprep.mubr.f32.mxu0 0.0
        %320 = vmatmul.mubr.f32.gmra.mrb[0].mxu0 %v235
        %v321 = vpop.f32.mrb[0].mxu0
        %v322 = vadd.f32 0.0, %v321
        %v323 = vpop.f32.mrb[0].mxu0
        %324 = vmatprep.mubr.f32.mxu0 0.0
        %325 = vmatmul.mubr.f32.gmra.mrb[0].mxu0 %v236
        %v326 = vpop.f32.mrb[0].mxu0
        %v327 = vadd.f32 0.0, %v326
        %v328 = vpop.f32.mrb[0].mxu0
        %329 = vmatprep.mubr.f32.mxu0 0.0
        %330 = vmatmul.mubr.f32.gmra.mrb[0].mxu0 %v237
        %v331 = vpop.f32.mrb[0].mxu0
        %v332 = vadd.f32 0.0, %v331
        %v333 = vpop.f32.mrb[0].mxu0
        %334 = vmatprep.mubr.f32.mxu0 0.0
        %335 = vmatmul.mubr.f32.gmra.mrb[0].mxu0 %v238
        %v336 = vpop.f32.mrb[0].mxu0
        %v337 = vadd.f32 0.0, %v336
        %v338 = vpop.f32.mrb[0].mxu0
        %339 = vmatprep.mubr.f32.mxu0 0.0
        %340 = vmatmul.mubr.f32.gmra.mrb[0].mxu0 %v239
        %v341 = vpop.f32.mrb[0].mxu0
        %v342 = vadd.f32 0.0, %v341
        %v343 = vpop.f32.mrb[0].mxu0
        %344 = vmatprep.mubr.f32.mxu0 0.0
        %345 = vmatmul.mubr.f32.gmra.mrb[0].mxu0 %v240
        %v346 = vpop.f32.mrb[0].mxu0
        %v347 = vadd.f32 0.0, %v346
        %v348 = vpop.f32.mrb[0].mxu0
        %349 = vmatprep.mubr.f32.mxu0 0.0
        %350 = vmatmul.mubr.f32.gmra.mrb[0].mxu0 %v241
        %v351 = vpop.f32.mrb[0].mxu0
        %v352 = vadd.f32 0.0, %v351
        %v353 = vpop.f32.mrb[0].mxu0
        %354 = vmatprep.mubr.f32.mxu0 0.0
        %355 = vmatmul.mubr.f32.gmra.mrb[0].mxu0 %v242
        %v356 = vpop.f32.mrb[0].mxu0
        %v357 = vadd.f32 0.0, %v356
        %v358 = vpop.f32.mrb[0].mxu0
        %359 = vmatprep.mubr.f32.mxu0 0.0
        %360 = vmatmul.mubr.f32.gmra.mrb[0].mxu0 %v243
        %v361 = vpop.f32.mrb[0].mxu0
        %v362 = vadd.f32 0.0, %v361
        %v363 = vpop.f32.mrb[0].mxu0
        %364 = vmatprep.mubr.f32.mxu0 0.0
        %365 = vmatmul.mubr.f32.gmra.mrb[0].mxu0 %v244
        %v366 = vpop.f32.mrb[0].mxu0
        %v367 = vadd.f32 0.0, %v366
        %v368 = vpop.f32.mrb[0].mxu0
        %369 = vmatprep.mubr.f32.mxu0 0.0
        %370 = vmatmul.mubr.f32.gmra.mrb[0].mxu0 %v245
        %v371 = vpop.f32.mrb[0].mxu0
        %v372 = vadd.f32 0.0, %v371
        %v373 = vpop.f32.mrb[0].mxu0
        %374 = vmatprep.mubr.f32.mxu0 0.0
        %375 = vmatmul.mubr.f32.gmra.mrb[0].mxu0 %v246
        %v376 = vpop.f32.mrb[0].mxu0
        %v377 = vadd.f32 0.0, %v376
        %v378 = vpop.f32.mrb[0].mxu0
        %379 = vmatprep.mubr.f32.mxu0 0.0
        %380 = vmatmul.mubr.f32.gmra.mrb[0].mxu0 %v247
        %v381 = vpop.f32.mrb[0].mxu0
        %v382 = vadd.f32 0.0, %v381
        %v383 = vpop.f32.mrb[0].mxu0
        %384 = vmatprep.mubr.f32.mxu0 0.0
        %385 = vmatmul.mubr.f32.gmra.mrb[0].mxu0 %v248
        %v386 = vpop.f32.mrb[0].mxu0
        %v387 = vadd.f32 0.0, %v386
        %v388 = vpop.f32.mrb[0].mxu0
        %389 = vmatprep.mubr.f32.mxu0 0.0
        %390 = vmatmul.mubr.f32.gmra.mrb[0].mxu0 %v249
        %v391 = vpop.f32.mrb[0].mxu0
        %v392 = vadd.f32 0.0, %v391
        %v393 = vpop.f32.mrb[0].mxu0
        %394 = vdwg.mxu0
        %v395 = vadd.f32 %v218, %v317
        %v396 = vadd.f32 %v219, %v322
        %v397 = vadd.f32 %v220, %v327
        %v398 = vadd.f32 %v221, %v332
        %v399 = vadd.f32 %v222, %v337
        %v400 = vadd.f32 %v223, %v342
        %v401 = vadd.f32 %v224, %v347
        %v402 = vadd.f32 %v225, %v352
        %v403 = vadd.f32 %v226, %v357
        %v404 = vadd.f32 %v227, %v362
        %v405 = vadd.f32 %v228, %v367
        %v406 = vadd.f32 %v229, %v372
        %v407 = vadd.f32 %v230, %v377
        %v408 = vadd.f32 %v231, %v382
        %v409 = vadd.f32 %v232, %v387
        %v410 = vadd.f32 %v233, %v392
        %vm411 = vcmask 261120
        %412 = vst.msk [vmem:[#allocation2] sm:$0xff] %vm411, %v395
        %413 = vst.msk [vmem:[#allocation2 + $0x8] sm:$0xff] %vm411, %v396
        %414 = vst.msk [vmem:[#allocation2 + $0x10] sm:$0xff] %vm411, %v397
        %415 = vst.msk [vmem:[#allocation2 + $0x18] sm:$0xff] %vm411, %v398
        %416 = vst.msk [vmem:[#allocation2 + $0x20] sm:$0xff] %vm411, %v399
        %417 = vst.msk [vmem:[#allocation2 + $0x28] sm:$0xff] %vm411, %v400
        %418 = vst.msk [vmem:[#allocation2 + $0x30] sm:$0xff] %vm411, %v401
        %419 = vst.msk [vmem:[#allocation2 + $0x38] sm:$0xff] %vm411, %v402
        %420 = vst.msk [vmem:[#allocation2 + $0x40] sm:$0xff] %vm411, %v403
        %421 = vst.msk [vmem:[#allocation2 + $0x48] sm:$0xff] %vm411, %v404
        %422 = vst.msk [vmem:[#allocation2 + $0x50] sm:$0xff] %vm411, %v405
        %423 = vst.msk [vmem:[#allocation2 + $0x58] sm:$0xff] %vm411, %v406
        %424 = vst.msk [vmem:[#allocation2 + $0x60] sm:$0xff] %vm411, %v407
        %425 = vst.msk [vmem:[#allocation2 + $0x68] sm:$0xff] %vm411, %v408
        %426 = vst.msk [vmem:[#allocation2 + $0x70] sm:$0xff] %vm411, %v409
        %427 = vst.msk [vmem:[#allocation2 + $0x78] sm:$0xff] %vm411, %v410
        %p428 = scmp.eq.s32.totalorder %s24, 1
        // Predicated region
        $region37: #{tpu_custom_call.1} parent=27 // pred_check
          %p429 = pneg %p428
        $region38: #{tpu_custom_call.1} parent=27 // pred_check_branch
          %431 = sbr.rel (%p429) target = $region40
        $region39: #{tpu_custom_call.1} parent=27 // pred_region
          %s432 = smul.u32 %s23, 128
          %s433 = scalar_lea.vmem %s1, %s432
          %v434 = vld [vmem:[%s433] sm:$0xff]
          %v435 = vld [vmem:[%s433 + $0x8] sm:$0xff]
          %v436 = vld [vmem:[%s433 + $0x10] sm:$0xff]
          %v437 = vld [vmem:[%s433 + $0x18] sm:$0xff]
          %v438 = vld [vmem:[%s433 + $0x20] sm:$0xff]
          %v439 = vld [vmem:[%s433 + $0x28] sm:$0xff]
          %v440 = vld [vmem:[%s433 + $0x30] sm:$0xff]
          %v441 = vld [vmem:[%s433 + $0x38] sm:$0xff]
          %v442 = vld [vmem:[%s433 + $0x40] sm:$0xff]
          %v443 = vld [vmem:[%s433 + $0x48] sm:$0xff]
          %v444 = vld [vmem:[%s433 + $0x50] sm:$0xff]
          %v445 = vld [vmem:[%s433 + $0x58] sm:$0xff]
          %v446 = vld [vmem:[%s433 + $0x60] sm:$0xff]
          %v447 = vld [vmem:[%s433 + $0x68] sm:$0xff]
          %v448 = vld [vmem:[%s433 + $0x70] sm:$0xff]
          %v449 = vld [vmem:[%s433 + $0x78] sm:$0xff]
          %v450 = vld [vmem:[#allocation2] sm:$0xff]
          %v451 = vld [vmem:[#allocation2 + $0x8] sm:$0xff]
          %v452 = vld [vmem:[#allocation2 + $0x10] sm:$0xff]
          %v453 = vld [vmem:[#allocation2 + $0x18] sm:$0xff]
          %v454 = vld [vmem:[#allocation2 + $0x20] sm:$0xff]
          %v455 = vld [vmem:[#allocation2 + $0x28] sm:$0xff]
          %v456 = vld [vmem:[#allocation2 + $0x30] sm:$0xff]
          %v457 = vld [vmem:[#allocation2 + $0x38] sm:$0xff]
          %v458 = vld [vmem:[#allocation2 + $0x40] sm:$0xff]
          %v459 = vld [vmem:[#allocation2 + $0x48] sm:$0xff]
          %v460 = vld [vmem:[#allocation2 + $0x50] sm:$0xff]
          %v461 = vld [vmem:[#allocation2 + $0x58] sm:$0xff]
          %v462 = vld [vmem:[#allocation2 + $0x60] sm:$0xff]
          %v463 = vld [vmem:[#allocation2 + $0x68] sm:$0xff]
          %v464 = vld [vmem:[#allocation2 + $0x70] sm:$0xff]
          %v465 = vld [vmem:[#allocation2 + $0x78] sm:$0xff]
          %v466 = vmul.f32 %v434, %v450
          %v467 = vmul.f32 %v435, %v451
          %v468 = vmul.f32 %v436, %v452
          %v469 = vmul.f32 %v437, %v453
          %v470 = vmul.f32 %v438, %v454
          %v471 = vmul.f32 %v439, %v455
          %v472 = vmul.f32 %v440, %v456
          %v473 = vmul.f32 %v441, %v457
          %v474 = vmul.f32 %v442, %v458
          %v475 = vmul.f32 %v443, %v459
          %v476 = vmul.f32 %v444, %v460
          %v477 = vmul.f32 %v445, %v461
          %v478 = vmul.f32 %v446, %v462
          %v479 = vmul.f32 %v447, %v463
          %v480 = vmul.f32 %v448, %v464
          %v481 = vmul.f32 %v449, %v465
          %v482 = vsel %vm411, %v466, 0.0
          %v483 = vsel %vm411, %v467, 0.0
          %v484 = vadd.f32 %v482, %v483
          %v485 = vsel %vm411, %v468, 0.0
          %v486 = vadd.f32 %v484, %v485
          %v487 = vsel %vm411, %v469, 0.0
          %v488 = vadd.f32 %v486, %v487
          %v489 = vsel %vm411, %v470, 0.0
          %v490 = vadd.f32 %v488, %v489
          %v491 = vsel %vm411, %v471, 0.0
          %v492 = vadd.f32 %v490, %v491
          %v493 = vsel %vm411, %v472, 0.0
          %v494 = vadd.f32 %v492, %v493
          %v495 = vsel %vm411, %v473, 0.0
          %v496 = vadd.f32 %v494, %v495
          %v497 = vsel %vm411, %v474, 0.0
          %v498 = vadd.f32 %v496, %v497
          %v499 = vsel %vm411, %v475, 0.0
          %v500 = vadd.f32 %v498, %v499
          %v501 = vsel %vm411, %v476, 0.0
          %v502 = vadd.f32 %v500, %v501
          %v503 = vsel %vm411, %v477, 0.0
          %v504 = vadd.f32 %v502, %v503
          %v505 = vsel %vm411, %v478, 0.0
          %v506 = vadd.f32 %v504, %v505
          %v507 = vsel %vm411, %v479, 0.0
          %v508 = vadd.f32 %v506, %v507
          %v509 = vsel %vm411, %v480, 0.0
          %v510 = vadd.f32 %v508, %v509
          %v511 = vsel %vm411, %v481, 0.0
          %v512 = vadd.f32 %v510, %v511
          %513 = vadd.xlane.f32.xlu0 %v512
          %v514 = vpop.xlane.xlu0 %513
          %v515 = vrot.slane %v514, 4
          %v516 = vadd.f32 %v514, %v515
          %v517 = vrot.slane %v516, 2
          %v518 = vadd.f32 %v516, %v517
          %v519 = vrot.slane %v518, 1
          %v520 = vadd.f32 %v518, %v519
          %s521 = vtos %v520
          %v522 = vstv %s521
          %523 = vst [vmem:[%s177] sm:$0xff] %v522
        $region40: #{tpu_custom_call.1} parent=27 // pred_fallthru
          _
        %s524 = sand.u32 %s88, 1
        %s525 = scalar_lea.sflag [#allocation5], %s524
        %s526 = sand.u32 %s88, 1
        %s527 = smul.addr %s526, 8
        %s528 = scalar_lea.vmem [#allocation6], %s527
        // Predicated region
        $region41: #{tpu_custom_call.1} parent=27 // pred_check
          %p529 = pneg %p98
        $region42: #{tpu_custom_call.1} parent=27 // pred_check_branch
          %531 = sbr.rel (%p529) target = $region44
        $region43: #{tpu_custom_call.1} parent=27 // pred_region
          %s533 = ssub.s32 128, 128
          %534 = vsyncadd %s525, %s533
          %s535 = smul.addr %s23, 128
          %s536 = scalar_lea.hbm %s2, %s535
          %s538 = sshll.u32 %s528, 4
          %s539 = int_to_ptr.vmem [resolvable:$true] %s538
          %541 = dma.vmem_to_hbm [thread:$0]  %s539, 128, %s536, %s525
        $region44: #{tpu_custom_call.1} parent=27 // pred_fallthru
          _
      $region28: #{tpu_custom_call.1} parent=5 // pred_fallthru
        _
      %p542 = scmp.le.s32.totalorder 2, %s14
      // Predicated region
      $region45: #{tpu_custom_call.1} parent=5 // pred_check
        %p543 = pneg %p542
      $region46: #{tpu_custom_call.1} parent=5 // pred_check_branch
        %545 = sbr.rel (%p543) target = $region48
      $region47: #{tpu_custom_call.1} parent=5 // pred_region
        %s546 = ssub.s32 %s14, 2
        // Predicated region
        $region49: #{tpu_custom_call.1} parent=47 // pred_check
          %p547 = pneg %p104
        $region50: #{tpu_custom_call.1} parent=47 // pred_check_branch
          %549 = sbr.rel (%p547) target = $region52
        $region51: #{tpu_custom_call.1} parent=47 // pred_region
          %s550 = sand.u32 %s89, 1
          %s551 = scalar_lea.sflag [#allocation5], %s550
          %s552 = sand.u32 %s89, 1
          %s553 = smul.addr %s552, 8
          %s554 = scalar_lea.vmem [#allocation6], %s553
          %555 = dma.done %s551, 128
        $region52: #{tpu_custom_call.1} parent=47 // pred_fallthru
          _
      $region48: #{tpu_custom_call.1} parent=5 // pred_fallthru
        _
    $region6: #{tpu_custom_call.1} parent=1 // loop_footer
      %s18 = sadd.s32 1, %s14
    $region7: #{tpu_custom_call.1} parent=1 // loop_footer_branch
      %13 = sbr.rel target = $region3
    $region8: #{tpu_custom_call.1} parent=1 // loop_exit
      _
    %556 = vsyncpa [#allocation4], 1
    %s557 = scalar_lea.sflag [#allocation4], 1
    %558 = vsyncpa %s557, 1
    %559 = vsyncpa [#allocation5], 1
    %s560 = scalar_lea.sflag [#allocation5], 1
    %561 = vsyncpa %s560, 1

</llo_original>
